<compile_context>
chip_gen: v5e
topology: v5e:2x2
jax: 0.10.0
libtpu: 0.0.40
codegen_flags: <defaults>
</compile_context>

<pallas_src>
import jax
import jax.numpy as jnp
from jax.experimental import pallas as pl
from jax.experimental.pallas import tpu as pltpu

EPS = 1e-5
LANES = 128
MIB = 1024 * 1024


def _round_up(x, m):
    return (x + m - 1) // m * m


def _pad2(a, rows, cols):
    r, c = a.shape
    if r == rows and c == cols:
        return a
    return jnp.pad(a, ((0, rows - r), (0, cols - c)))


def _vmem_capacity_bytes():
    """Physical per-core VMEM (v7x: 64 MiB, v5e/v6e: 128 MiB); conservative fallback."""
    try:
        return int(pltpu.get_tpu_info().vmem_capacity_bytes)
    except Exception:  # best-effort hardware query; 64 MiB is safe everywhere
        return 64 * MIB


def _plan(n, d_in, h_dim, d_out, tile_n, tile_k, tile_h):
    """Choose row tile, reduction tiles and padded dims from the VMEM budget."""
    cap = _vmem_capacity_bytes()
    big_vmem = cap >= 100 * MIB                      # v5e / v6e (128 MiB per core)
    vmem_limit = 96 * MIB if big_vmem else 48 * MIB  # stays under 64 MiB physical on v7x
    budget = (vmem_limit * 3) // 4                   # working-set target for the chooser
    # Per-weight-block cap (the pipeline double-buffers it -> 2x this in VMEM).
    w_block_limit = max(2 * MIB, budget // 4)

    d_out_p = _round_up(d_out, LANES)
    h_0 = _round_up(h_dim, LANES)
    d_in_0 = _round_up(d_in, LANES)

    # K-tiled fallback: tile the reduction dim of w2 / w1 when the full weight
    # would not fit (double-buffered) next to 256..1024-row streaming tiles.
    if tile_h is None:
        tile_h = h_0 if h_0 * d_out_p * 2 <= w_block_limit else max(
            LANES, (w_block_limit // (d_out_p * 2)) // LANES * LANES)
    tile_h = _round_up(min(int(tile_h), h_0), LANES)
    h_p = _round_up(h_dim, tile_h)

    if tile_k is None:
        tile_k = d_in_0 if d_in_0 * h_p * 2 <= w_block_limit else max(
            LANES, (w_block_limit // (h_p * 2)) // LANES * LANES)
    tile_k = _round_up(min(int(tile_k), d_in_0), LANES)
    d_in_p = _round_up(d_in, tile_k)

    if tile_n is None:
        x_bpe = 4 if d_in_p == d_in else 2           # f32 fast path vs padded bf16 copy
        per_row = max(
            2 * tile_k * x_bpe + 2 * 2 * h_p + 4 * h_p,        # pass 1: x, h(bf16) out, f32 acc
            2 * 2 * tile_h + 2 * 4 * d_out_p + 4 * d_out_p)    # pass 2: h in, out, f32 acc
        resident = max(
            2 * (tile_k * h_p * 2) + 2 * (8 * h_p * 4),        # w1 (2 bufs) + stats blocks
            2 * (tile_h * d_out_p * 2) + 4 * (2 * h_p + d_out_p))
        avail = max(budget - resident, 16 * per_row)
        tile_n = min(avail // per_row, 1024 if big_vmem else 512)
        # Keep >= 2 (ideally >= 4) batch tiles so v7x's two TensorCores both get work.
        n16 = _round_up(max(n, 1), 16)
        if n16 // 4 >= 256:
            tile_n = min(tile_n, n16 // 4)
        elif n16 // 2 >= 16:
            tile_n = min(tile_n, n16 // 2)
        else:
            tile_n = min(tile_n, n16)
    tile_n = int(tile_n)
    if tile_n >= 256:
        tile_n = (tile_n // 256) * 256   # native 256x256 MXU tiles (v6e/v7x), 128-mult (v5e)
    elif tile_n >= 128:
        tile_n = 128
    else:
        tile_n = max(16, (tile_n // 16) * 16)        # bf16 sublane packing
    return tile_n, tile_k, tile_h, d_in_p, h_p, d_out_p, vmem_limit


# ---------------------------------------------------------------------------
# Pass 1: h = x @ w1 (bf16 MXU, f32 acc, K-tiled) + per-row-tile column stats.
# ---------------------------------------------------------------------------
def _matmul_stats_kernel(x_ref, w1_ref, h_ref, stats_ref, acc_ref):
    k = pl.program_id(1)

    @pl.when(k == 0)
    def _init():
        acc_ref[...] = jnp.zeros_like(acc_ref)

    # x cast to bf16 on the VPU (no-op if already bf16); bf16 x bf16 -> f32 MXU.
    acc_ref[...] += jnp.dot(x_ref[...].astype(jnp.bfloat16), w1_ref[...],
                            preferred_element_type=jnp.float32)

    @pl.when(k == pl.num_programs(1) - 1)
    def _finalize():
        h = acc_ref[...]                                   # f32 accumulator
        h_ref[...] = h.astype(h_ref.dtype)                 # bf16 HBM store (half traffic)
        # Column stats as a VPU sublane accumulation in f32 (not f32 MXU matmuls).
        s1 = jnp.sum(h, axis=0, keepdims=True)             # (1, Hp)
        s2 = jnp.sum(h * h, axis=0, keepdims=True)         # (1, Hp)
        zeros = jnp.zeros((6, h.shape[1]), jnp.float32)
        stats_ref[...] = jnp.concatenate([s1, s2, zeros], axis=0)[None]  # dense (1,8,Hp)


# ---------------------------------------------------------------------------
# Pass 2: out = relu(h * scale + shift) @ w2 + b2 (BN folded; K-tiled over H).
# ---------------------------------------------------------------------------
def _bn_relu_matmul_kernel(h_ref, scale_ref, shift_ref, w2_ref, b2_ref, o_ref, acc_ref):
    k = pl.program_id(1)

    @pl.when(k == 0)
    def _init():
        acc_ref[...] = jnp.zeros_like(acc_ref)

    h = h_ref[...].astype(jnp.float32)                     # bf16 -> f32 on the VPU
    h_act = jnp.maximum(h * scale_ref[...] + shift_ref[...], 0.0).astype(jnp.bfloat16)
    acc_ref[...] += jnp.dot(h_act, w2_ref[...], preferred_element_type=jnp.float32)

    @pl.when(k == pl.num_programs(1) - 1)
    def _finalize():
        o_ref[...] = acc_ref[...] + b2_ref[...]


def projection_head(x, w1, gamma, beta, w2, b2, *, tile_n=None, tile_k=None, tile_h=None):
    """ProjectionHead forward: Linear(no bias) -> BatchNorm1d(train) -> ReLU -> Linear(bias).

    x: (N, Din) f32.  w1: (Din, H), w2: (H, Dout) -- pre-transposed vs torch.
    gamma/beta: (1, H).  b2: (1, Dout).  Returns (N, Dout) f32.
    """
    n, d_in = x.shape
    h_dim = w1.shape[1]
    d_out = w2.shape[1]

    (tile_n, tile_k, tile_h, d_in_p, h_p, d_out_p, vmem_limit) = _plan(
        n, d_in, h_dim, d_out, tile_n, tile_k, tile_h)

    n_pad = _round_up(n, tile_n)
    num_tiles = n_pad // tile_n
    k1 = d_in_p // tile_k
    k2 = h_p // tile_h

    # x: when already tile-/lane-aligned, stream the f32 array directly (cast to
    # bf16 in-kernel); otherwise zero-pad + cast once outside (cheaper than f32 pad).
    if n_pad == n and d_in_p == d_in:
        x_in = x
    else:
        x_in = _pad2(x, n_pad, d_in_p).astype(jnp.bfloat16)

    w1_p = _pad2(w1, d_in_p, h_p).astype(jnp.bfloat16)
    w2_p = _pad2(w2, h_p, d_out_p).astype(jnp.bfloat16)
    gamma_p = _pad2(gamma.astype(jnp.float32), 1, h_p)     # padded H cols -> gamma/beta = 0
    beta_p = _pad2(beta.astype(jnp.float32), 1, h_p)
    b2_p = _pad2(b2.astype(jnp.float32), 1, d_out_p)

    cparams = pltpu.CompilerParams(
        dimension_semantics=("parallel", "arbitrary"),
        vmem_limit_bytes=vmem_limit,
    )

    # ---- pass 1: matmul 1 (h stored bf16) + per-tile BN statistics ----
    h_bf16, stats = pl.pallas_call(
        _matmul_stats_kernel,
        out_shape=(
            jax.ShapeDtypeStruct((n_pad, h_p), jnp.bfloat16),
            jax.ShapeDtypeStruct((num_tiles, 8, h_p), jnp.float32),
        ),
        grid=(num_tiles, k1),
        in_specs=[
            pl.BlockSpec((tile_n, tile_k), lambda i, k: (i, k)),   # x (streamed)
            pl.BlockSpec((tile_k, h_p), lambda i, k: (k, 0)),      # w1 (resident / K-tiled)
        ],
        out_specs=(
            pl.BlockSpec((tile_n, h_p), lambda i, k: (i, 0)),      # h tile (bf16)
            pl.BlockSpec((1, 8, h_p), lambda i, k: (i, 0, 0)),     # per-tile sums
        ),
        scratch_shapes=[pltpu.VMEM((tile_n, h_p), jnp.float32)],   # f32 accumulator
        compiler_params=cparams,
        cost_estimate=pl.CostEstimate(
            flops=2 * n_pad * d_in_p * h_p + 4 * n_pad * h_p,
            transcendentals=0,
            bytes_accessed=(n_pad * d_in_p * x_in.dtype.itemsize
                            + (num_tiles if k1 > 1 else 1) * d_in_p * h_p * 2
                            + n_pad * h_p * 2 + num_tiles * 8 * h_p * 4),
        ),
    )(x_in, w1_p)

    # ---- tiny finalize (H-sized): full-batch mean / biased var -> folded scale/shift ----
    # TODO(synk): E[h^2]-mean^2 in f32 can cancel when |mean| >> std; a shifted/Welford
    # accumulation would be needed if feature means can be very large.
    tot1 = jnp.sum(stats[:, 0, :], axis=0)                 # padded batch rows contribute 0
    tot2 = jnp.sum(stats[:, 1, :], axis=0)
    mean = tot1 / n                                        # divide by the true N
    var = jnp.maximum(tot2 / n - mean * mean, 0.0)         # biased, training-mode variance
    inv_std = jax.lax.rsqrt(var + EPS)
    scale = gamma_p * inv_std[None, :]                     # (1, Hp); padded cols -> 0
    shift = beta_p - mean[None, :] * scale

    # ---- pass 2: folded BN affine + ReLU + matmul 2 + bias ----
    out_p = pl.pallas_call(
        _bn_relu_matmul_kernel,
        out_shape=jax.ShapeDtypeStruct((n_pad, d_out_p), jnp.float32),
        grid=(num_tiles, k2),
        in_specs=[
            pl.BlockSpec((tile_n, tile_h), lambda i, k: (i, k)),   # h (streamed, bf16)
            pl.BlockSpec((1, tile_h), lambda i, k: (0, k)),        # scale
            pl.BlockSpec((1, tile_h), lambda i, k: (0, k)),        # shift
            pl.BlockSpec((tile_h, d_out_p), lambda i, k: (k, 0)),  # w2 (resident / K-tiled)
            pl.BlockSpec((1, d_out_p), lambda i, k: (0, 0)),       # b2
        ],
        out_specs=pl.BlockSpec((tile_n, d_out_p), lambda i, k: (i, 0)),
        scratch_shapes=[pltpu.VMEM((tile_n, d_out_p), jnp.float32)],
        compiler_params=cparams,
        cost_estimate=pl.CostEstimate(
            flops=2 * n_pad * h_p * d_out_p + 3 * n_pad * h_p,
            transcendentals=0,
            bytes_accessed=(n_pad * h_p * 2
                            + (num_tiles if k2 > 1 else 1) * h_p * d_out_p * 2
                            + n_pad * d_out_p * 4 + (2 * h_p + d_out_p) * 4),
        ),
    )(h_bf16, scale, shift, w2_p, b2_p)

    return out_p[:n, :d_out]


# ---------------------------------------------------------------------------
# References
# ---------------------------------------------------------------------------
def projection_head_ref(x, w1, gamma, beta, w2, b2):
    """Pure-f32 reference matching the PyTorch module forward (BN training mode)."""
    h = x @ w1
    mean = jnp.mean(h, axis=0, keepdims=True)
    var = jnp.mean((h - mean) ** 2, axis=0, keepdims=True)
    h = (h - mean) * jax.lax.rsqrt(var + EPS)
    h = jnp.maximum(h * gamma + beta, 0.0)
    return h @ w2 + b2


def projection_head_ref_matched(x, w1, gamma, beta, w2, b2):
    """Same precision policy as the kernel: bf16 matmul operands, f32 accumulation,
    f32 BN statistics, intermediate h stored in bf16."""
    h = jnp.dot(x.astype(jnp.bfloat16), w1.astype(jnp.bfloat16),
                preferred_element_type=jnp.float32)
    mean = jnp.mean(h, axis=0, keepdims=True)
    var = jnp.maximum(jnp.mean(h * h, axis=0, keepdims=True) - mean * mean, 0.0)
    scale = gamma * jax.lax.rsqrt(var + EPS)
    shift = beta - mean * scale
    h_b = h.astype(jnp.bfloat16).astype(jnp.float32)         # kernel stores h in bf16
    h_act = jnp.maximum(h_b * scale + shift, 0.0).astype(jnp.bfloat16)
    return jnp.dot(h_act, w2.astype(jnp.bfloat16),
                   preferred_element_type=jnp.float32) + b2


def _make_inputs(key, n, d_in, h_dim, d_out):
    k_x, k_w1, k_w2, k_b2 = jax.random.split(key, 4)
    x = jax.random.normal(k_x, (n, d_in), dtype=jnp.float32)
    # PyTorch Linear stores (out, in); generate that layout then transpose.
    bound1 = 1.0 / jnp.sqrt(d_in)
    w1 = jax.random.uniform(k_w1, (h_dim, d_in), jnp.float32, -bound1, bound1).T
    bound2 = 1.0 / jnp.sqrt(h_dim)
    w2 = jax.random.uniform(k_w2, (d_out, h_dim), jnp.float32, -bound2, bound2).T
    b2 = jax.random.uniform(k_b2, (1, d_out), jnp.float32, -bound2, bound2)
    gamma = jnp.ones((1, h_dim), jnp.float32)     # BatchNorm1d default affine
    beta = jnp.zeros((1, h_dim), jnp.float32)
    return x, w1, gamma, beta, w2, b2


if __name__ == "__main__":
    key = jax.random.PRNGKey(0)
    configs = [
        # A: unaligned batch + sub-lane feature dims -> padded bf16-x path, 2 row tiles.
        dict(n=20, d_in=32, h_dim=64, d_out=32, tiles=dict(tile_n=16)),
        # B: fully aligned -> f32-x fast path, automatic tile choice (>=2 tiles for v7x TCs).
        dict(n=64, d_in=128, h_dim=256, d_out=128, tiles=dict()),
        # C: forced K-tiling of both weight matmuls (k1 = k2 = 2) -> accumulator path.
        dict(n=48, d_in=256, h_dim=256, d_out=128,
             tiles=dict(tile_n=16, tile_k=128, tile_h=128)),
    ]
    keys = jax.random.split(key, len(configs))
    for cfg, k in zip(configs, keys):
        x, w1, gamma, beta, w2, b2 = _make_inputs(
            k, cfg["n"], cfg["d_in"], cfg["h_dim"], cfg["d_out"])
        out = projection_head(x, w1, gamma, beta, w2, b2, **cfg["tiles"])
        out = jax.block_until_ready(out)
        assert out.shape == (cfg["n"], cfg["d_out"])
        ref_m = projection_head_ref_matched(x, w1, gamma, beta, w2, b2)
        ref_f = projection_head_ref(x, w1, gamma, beta, w2, b2)
        assert jnp.allclose(out, ref_m, atol=5e-3, rtol=5e-3), \
            f"mismatch vs matched-precision (bf16) reference for config {cfg}"
        assert jnp.allclose(out, ref_f, atol=6e-2, rtol=6e-2), \
            f"mismatch vs f32 reference for config {cfg}"
    print("KERNEL_OK")
</pallas_src>

<mosaic_0001>
module attributes {stable_mosaic.version = 11 : i64} {
  func.func @_matmul_stats_kernel(%arg0: i32, %arg1: i32, %arg2: memref<16x128xbf16, #tpu.memory_space<vmem>>, %arg3: memref<128x128xbf16, #tpu.memory_space<vmem>>, %arg4: memref<16x128xbf16, #tpu.memory_space<vmem>>, %arg5: memref<1x8x128xf32, #tpu.memory_space<vmem>>, %arg6: memref<16x128xf32, #tpu.memory_space<vmem>>) attributes {dimension_semantics = [#tpu.dimension_semantics<parallel>, #tpu.dimension_semantics<arbitrary>], iteration_bounds = array<i64: 2, 1>, scalar_prefetch = 0 : i64, scratch_operands = 1 : i64, tpu.core_type = #tpu.core_type<tc>, window_params = [{transform_indices = @transform_0, window_bounds = array<i64: 16, 128>}, {transform_indices = @transform_1, window_bounds = array<i64: 128, 128>}, {transform_indices = @transform_2, window_bounds = array<i64: 16, 128>}, {transform_indices = @transform_3, window_bounds = array<i64: 1, 8, 128>}]} {
    %c0_i32 = arith.constant 0 : i32
    %0 = arith.cmpi eq, %arg1, %c0_i32 : i32
    %1 = arith.extui %0 : i1 to i32
    %c0_i32_0 = arith.constant 0 : i32
    %2 = arith.cmpi ne, %1, %c0_i32_0 : i32
    scf.if %2 {
      %cst_10 = arith.constant 0.000000e+00 : f32
      %12 = vector.broadcast %cst_10 : f32 to vector<16x128xf32>
      %c0_11 = arith.constant 0 : index
      %c0_12 = arith.constant 0 : index
      %13 = vector.load %arg6[%c0_11, %c0_12] : memref<16x128xf32, #tpu.memory_space<vmem>>, vector<16x128xf32>
      tpu.vector_store %arg6[%c0_11, %c0_12], %12 {strides = array<i32>} : memref<16x128xf32, #tpu.memory_space<vmem>>, vector<16x128xf32>,
    } else {
    }
    %c0 = arith.constant 0 : index
    %c0_1 = arith.constant 0 : index
    %3 = vector.load %arg6[%c0, %c0_1] : memref<16x128xf32, #tpu.memory_space<vmem>>, vector<16x128xf32>
    %c0_2 = arith.constant 0 : index
    %c0_3 = arith.constant 0 : index
    %4 = vector.load %arg2[%c0_2, %c0_3] : memref<16x128xbf16, #tpu.memory_space<vmem>>, vector<16x128xbf16>
    %c0_4 = arith.constant 0 : index
    %c0_5 = arith.constant 0 : index
    %5 = vector.load %arg3[%c0_4, %c0_5] : memref<128x128xbf16, #tpu.memory_space<vmem>>, vector<128x128xbf16>
    %cst = arith.constant dense<0.000000e+00> : vector<16x128xf32>
    %6 = tpu.matmul %4, %5, %cst {dimension_numbers = #tpu.dot_dimension_numbers<[1], [0], [0], [1], [0, 0, 1, 1], [], []>} : vector<16x128xbf16>, vector<128x128xbf16>, vector<16x128xf32> -> vector<16x128xf32>
    %7 = arith.addf %3, %6 : vector<16x128xf32>
    %c0_6 = arith.constant 0 : index
    %c0_7 = arith.constant 0 : index
    %8 = vector.load %arg6[%c0_6, %c0_7] : memref<16x128xf32, #tpu.memory_space<vmem>>, vector<16x128xf32>
    tpu.vector_store %arg6[%c0_6, %c0_7], %7 {strides = array<i32>} : memref<16x128xf32, #tpu.memory_space<vmem>>, vector<16x128xf32>,
    %c0_i32_8 = arith.constant 0 : i32
    %9 = arith.cmpi eq, %arg1, %c0_i32_8 : i32
    %10 = arith.extui %9 : i1 to i32
    %c0_i32_9 = arith.constant 0 : i32
    %11 = arith.cmpi ne, %10, %c0_i32_9 : i32
    scf.if %11 {
      %c0_10 = arith.constant 0 : index
      %c0_11 = arith.constant 0 : index
      %12 = vector.load %arg6[%c0_10, %c0_11] : memref<16x128xf32, #tpu.memory_space<vmem>>, vector<16x128xf32>
      %13 = arith.truncf %12 : vector<16x128xf32> to vector<16x128xbf16>
      %c0_12 = arith.constant 0 : index
      %c0_13 = arith.constant 0 : index
      %14 = vector.load %arg4[%c0_12, %c0_13] : memref<16x128xbf16, #tpu.memory_space<vmem>>, vector<16x128xbf16>
      tpu.vector_store %arg4[%c0_12, %c0_13], %13 {strides = array<i32>} : memref<16x128xbf16, #tpu.memory_space<vmem>>, vector<16x128xbf16>,
      %cst_14 = arith.constant dense<0.000000e+00> : vector<128xf32>
      %15 = vector.multi_reduction <add>, %12, %cst_14 [0] : vector<16x128xf32> to vector<128xf32>
      %16 = vector.shape_cast %15 : vector<128xf32> to vector<1x128xf32>
      %17 = arith.mulf %12, %12 : vector<16x128xf32>
      %cst_15 = arith.constant dense<0.000000e+00> : vector<128xf32>
      %18 = vector.multi_reduction <add>, %17, %cst_15 [0] : vector<16x128xf32> to vector<128xf32>
      %19 = vector.shape_cast %18 : vector<128xf32> to vector<1x128xf32>
      %cst_16 = arith.constant 0.000000e+00 : f32
      %20 = vector.broadcast %cst_16 : f32 to vector<6x128xf32>
      %21 = tpu.concatenate %16, %19, %20 in 0 : vector<1x128xf32>, vector<1x128xf32>, vector<6x128xf32> -> vector<8x128xf32>
      %22 = vector.shape_cast %21 : vector<8x128xf32> to vector<1x8x128xf32>
      %c0_17 = arith.constant 0 : index
      %c0_18 = arith.constant 0 : index
      %c0_19 = arith.constant 0 : index
      %23 = vector.load %arg5[%c0_17, %c0_18, %c0_19] : memref<1x8x128xf32, #tpu.memory_space<vmem>>, vector<1x8x128xf32>
      tpu.vector_store %arg5[%c0_17, %c0_18, %c0_19], %22 {strides = array<i32>} : memref<1x8x128xf32, #tpu.memory_space<vmem>>, vector<1x8x128xf32>,
    } else {
    }
    return
  }
  func.func @transform_0(%arg0: i32, %arg1: i32) -> (i32, i32) {
    %c0_i32 = arith.constant 0 : i32
    return %arg0, %arg1 : i32, i32
  }
  func.func @transform_1(%arg0: i32, %arg1: i32) -> (i32, i32) {
    %c0_i32 = arith.constant 0 : i32
    %c0_i32_0 = arith.constant 0 : i32
    return %arg1, %c0_i32 : i32, i32
  }
  func.func @transform_2(%arg0: i32, %arg1: i32) -> (i32, i32) {
    %c0_i32 = arith.constant 0 : i32
    %c0_i32_0 = arith.constant 0 : i32
    return %arg0, %c0_i32 : i32, i32
  }
  func.func @transform_3(%arg0: i32, %arg1: i32) -> (i32, i32, i32) {
    %c0_i32 = arith.constant 0 : i32
    %c0_i32_0 = arith.constant 0 : i32
    %c0_i32_1 = arith.constant 0 : i32
    return %arg0, %c0_i32, %c0_i32_0 : i32, i32, i32
  }
}

</mosaic_0001>

<llo_original>
// kernel: tpu_custom_call.1
$region0: #{tpu_custom_call.1}
  #allocation0 [shape = 'u32[]', space=smem, size = 0x4, offset = 0x4, fixed_abs, tag = 'smem constant byte address 0x4 - core index']
  #allocation1 [shape = 'u32[72,128]{1,0:T(1,128)}', space=vmem, size = 0x9000, scoped, tag = 'internal scratch']
  #allocation2 [shape = 'f32[16,128]{1,0:T(8,128)}', space=vmem, size = 0x2000, scoped, tag = 'scratch operand']
  %s0 = inlined_call_operand.hbm [shape: bf16[32,128], index: 0, kind: input, shape index: {}]
  %s1 = inlined_call_operand.hbm [shape: bf16[128,128], index: 1, kind: input, shape index: {}]
  %s2 = inlined_call_operand.hbm [shape: bf16[32,128], index: 2, kind: output, shape index: {0}]
  %s3 = inlined_call_operand.hbm [shape: f32[2,8,128], index: 3, kind: output, shape index: {1}]
  %4 = xla_tuple %s2, %s3
  %s5 = sld [smem:[#allocation0]]
  $region65: #{tpu_custom_call.1} parent=0
    _
  %s7 = ssub.s32 1, %s5
  %s8 = scalar_select 0, %s7, %s5
  $region1: #{tpu_custom_call.1} parent=0
    #allocation3 [shape = 'u8[8192]{0}', space=vmem, size = 0x2000, scoped, tag = 'input window, operand 0']
    #allocation4 [shape = 's32[2]{0}', space=sflag, size = 0x8, scoped, tag = 'scoped memory for tpu_custom_call.1']
    #allocation5 [shape = 's32[2]{0}', space=sflag, size = 0x8, scoped, tag = 'scoped memory for tpu_custom_call.1']
    #allocation6 [shape = 'u8[32768]{0}', space=vmem, size = 0x8000, scoped, tag = 'input window, operand 1, single buffered']
    #allocation7 [shape = 's32[1]{0}', space=sflag, size = 0x4, scoped, tag = 'scoped memory for tpu_custom_call.1']
    #allocation8 [shape = 'u8[8192]{0}', space=vmem, size = 0x2000, scoped, tag = 'output window, operand 0']
    #allocation9 [shape = 'u8[8192]{0}', space=vmem, size = 0x2000, scoped, tag = 'output window, operand 1']
    #allocation10 [shape = 's32[2]{0}', space=sflag, size = 0x8, scoped, tag = 'scoped memory for tpu_custom_call.1']
    %9 = vsyncpa [#allocation4], 0
    %s10 = scalar_lea.sflag [#allocation4], 1
    %11 = vsyncpa %s10, 0
    %12 = vsyncpa [#allocation7], 0
    %13 = vsyncpa [#allocation5], 0
    %s14 = scalar_lea.sflag [#allocation5], 1
    %15 = vsyncpa %s14, 0
    %16 = vsyncpa [#allocation10], 0
    %s17 = scalar_lea.sflag [#allocation10], 1
    %18 = vsyncpa %s17, 0
    loop: start=0, step=1, limit=4
    $region2: #{tpu_custom_call.1} parent=1 // loop_pre_header
      _
    $region3: #{tpu_custom_call.1} parent=1 // loop_header
      %s20 = sphi 0, %s24
      %p21 = scmp.ge.s32.totalorder %s20, 4
      %s27 = sphi 0, %s39
      %s28 = sphi 0, %s35
      %s29 = sphi 0, %s27
      %s30 = sphi 0, %s28
      %s31 = sphi 0, %s29
      %s32 = sphi 0, %s30
      %s44 = sphi 0, %s46
      %s47 = sphi 0, %s44
      %s48 = sphi 0, %s47
      %s64 = sphi 0, %s48
      %s70 = sphi 0, %s72
      %s73 = sphi 0, %s70
      %s74 = sphi 0, %s73
      %s90 = sphi 0, %s74
      %s96 = sphi 0, %s98
      %s99 = sphi 0, %s96
      %s100 = sphi 0, %s99
      %s116 = sphi 0, %s100
      %s122 = sphi 0, %s124
      %s125 = sphi 0, %s122
      %s126 = sphi 0, %s125
      %s142 = sphi 0, %s126
    $region4: #{tpu_custom_call.1} parent=1 // loop_header_branch
      %23 = sbr.rel (%p21) target = $region8
    $region5: #{tpu_custom_call.1} parent=1 // loop_body
      %s25 = ssub.s32 %s20, 1
      %s26 = ssub.s32 %s20, 2
      %s33 = sadd.s32 1, %s28
      %p34 = scmp.ge.s32.totalorder %s33, 1
      %s35 = scalar_select %p34, 0, %s33
      %s36 = sadd.s32 1, %s27
      %s37 = scalar_select %p34, %s36, %s27
      %p38 = scmp.ge.s32.totalorder %s37, 2
      %s39 = scalar_select %p38, 0, %s37
      %s40 = ssub.s32 %s27, %s39
      %s41 = ssub.s32 %s28, %s35
      %s42 = sor.u32 %s40, %s41
      %p43 = scmp.eq.s32.totalorder %s42, 0
      %s45 = sadd.s32 %s44, 1
      %s46 = scalar_select %p43, %s44, %s45
      %p49 = pneg %p43
      %p50 = scmp.eq.s32.totalorder %s20, 1
      %p51 = por %p49, %p50
      %p52 = scmp.ne.s32.totalorder %s44, %s47
      %p53 = scmp.eq.s32.totalorder %s20, 0
      %p54 = por %p52, %p53
      %p55 = scmp.ne.s32.totalorder %s44, %s47
      %p56 = scmp.eq.s32.totalorder %s25, 1
      %p57 = por %p55, %p56
      %p58 = scmp.ne.s32.totalorder %s47, %s48
      %p59 = scmp.eq.s32.totalorder %s25, 0
      %p60 = por %p58, %p59
      %p61 = scmp.ne.s32.totalorder %s47, %s48
      %p62 = scmp.eq.s32.totalorder %s26, 1
      %p63 = por %p61, %p62
      %p65 = scmp.ne.s32.totalorder %s48, %s64
      %p66 = scmp.eq.s32.totalorder %s26, 0
      %p67 = por %p65, %p66
      %s68 = ssub.s32 %s28, %s35
      %p69 = scmp.eq.s32.totalorder %s68, 0
      %s71 = sadd.s32 %s70, 1
      %s72 = scalar_select %p69, %s70, %s71
      %p75 = pneg %p69
      %p76 = scmp.eq.s32.totalorder %s20, 1
      %p77 = por %p75, %p76
      %p78 = scmp.ne.s32.totalorder %s70, %s73
      %p79 = scmp.eq.s32.totalorder %s20, 0
      %p80 = por %p78, %p79
      %p81 = scmp.ne.s32.totalorder %s70, %s73
      %p82 = scmp.eq.s32.totalorder %s25, 1
      %p83 = por %p81, %p82
      %p84 = scmp.ne.s32.totalorder %s73, %s74
      %p85 = scmp.eq.s32.totalorder %s25, 0
      %p86 = por %p84, %p85
      %p87 = scmp.ne.s32.totalorder %s73, %s74
      %p88 = scmp.eq.s32.totalorder %s26, 1
      %p89 = por %p87, %p88
      %p91 = scmp.ne.s32.totalorder %s74, %s90
      %p92 = scmp.eq.s32.totalorder %s26, 0
      %p93 = por %p91, %p92
      %s94 = ssub.s32 %s27, %s39
      %p95 = scmp.eq.s32.totalorder %s94, 0
      %s97 = sadd.s32 %s96, 1
      %s98 = scalar_select %p95, %s96, %s97
      %p101 = pneg %p95
      %p102 = scmp.eq.s32.totalorder %s20, 1
      %p103 = por %p101, %p102
      %p104 = scmp.ne.s32.totalorder %s96, %s99
      %p105 = scmp.eq.s32.totalorder %s20, 0
      %p106 = por %p104, %p105
      %p107 = scmp.ne.s32.totalorder %s96, %s99
      %p108 = scmp.eq.s32.totalorder %s25, 1
      %p109 = por %p107, %p108
      %p110 = scmp.ne.s32.totalorder %s99, %s100
      %p111 = scmp.eq.s32.totalorder %s25, 0
      %p112 = por %p110, %p111
      %p113 = scmp.ne.s32.totalorder %s99, %s100
      %p114 = scmp.eq.s32.totalorder %s26, 1
      %p115 = por %p113, %p114
      %p117 = scmp.ne.s32.totalorder %s100, %s116
      %p118 = scmp.eq.s32.totalorder %s26, 0
      %p119 = por %p117, %p118
      %s120 = ssub.s32 %s27, %s39
      %p121 = scmp.eq.s32.totalorder %s120, 0
      %s123 = sadd.s32 %s122, 1
      %s124 = scalar_select %p121, %s122, %s123
      %p127 = pneg %p121
      %p128 = scmp.eq.s32.totalorder %s20, 1
      %p129 = por %p127, %p128
      %p130 = scmp.ne.s32.totalorder %s122, %s125
      %p131 = scmp.eq.s32.totalorder %s20, 0
      %p132 = por %p130, %p131
      %p133 = scmp.ne.s32.totalorder %s122, %s125
      %p134 = scmp.eq.s32.totalorder %s25, 1
      %p135 = por %p133, %p134
      %p136 = scmp.ne.s32.totalorder %s125, %s126
      %p137 = scmp.eq.s32.totalorder %s25, 0
      %p138 = por %p136, %p137
      %p139 = scmp.ne.s32.totalorder %s125, %s126
      %p140 = scmp.eq.s32.totalorder %s26, 1
      %p141 = por %p139, %p140
      %p143 = scmp.ne.s32.totalorder %s126, %s142
      %p144 = scmp.eq.s32.totalorder %s26, 0
      %p145 = por %p143, %p144
      %p146 = scmp.le.s32.totalorder 1, %s20
      %p147 = scmp.lt.s32.totalorder %s20, 3
      %p148 = pnand %p146, %p147
      %p149 = pneg %p148
      // Predicated region
      $region9: #{tpu_custom_call.1} parent=5 // pred_check
        _
      $region10: #{tpu_custom_call.1} parent=5 // pred_check_branch
        %151 = sbr.rel (%p148) target = $region12
      $region11: #{tpu_custom_call.1} parent=5 // pred_region
        %s152 = ssub.s32 %s20, 1
        // Predicated region
        $region13: #{tpu_custom_call.1} parent=11 // pred_check
          %p153 = pneg %p86
        $region14: #{tpu_custom_call.1} parent=11 // pred_check_branch
          %155 = sbr.rel (%p153) target = $region16
        $region15: #{tpu_custom_call.1} parent=11 // pred_region
          %s156 = smul.u32 16, %s30
          %158 = vsyncadd [#allocation7], 0
          %s159 = smul.addr %s156, 4
          %s160 = scalar_lea.hbm %s1, %s159
          %s161 = sshll.u32 %s160, 4
          %s162 = int_to_ptr.hbm [resolvable:$true] %s161
          %s163 = sshll.u32 [#allocation6], 4
          %s164 = int_to_ptr.vmem [resolvable:$true] %s163
          %169 = dma.hbm_to_vmem [thread:$0]  %s162, 1024, %s164, [#allocation7], 64, 64, 4
        $region16: #{tpu_custom_call.1} parent=11 // pred_fallthru
          _
      $region12: #{tpu_custom_call.1} parent=5 // pred_fallthru
        _
      %p170 = scmp.lt.s32.totalorder %s20, 2
      // Predicated region
      $region17: #{tpu_custom_call.1} parent=5 // pred_check
        %p171 = pneg %p170
      $region18: #{tpu_custom_call.1} parent=5 // pred_check_branch
        %173 = sbr.rel (%p171) target = $region20
      $region19: #{tpu_custom_call.1} parent=5 // pred_region
        // Predicated region
        $region21: #{tpu_custom_call.1} parent=19 // pred_check
          %p174 = pneg %p54
        $region22: #{tpu_custom_call.1} parent=19 // pred_check_branch
          %176 = sbr.rel (%p174) target = $region24
        $region23: #{tpu_custom_call.1} parent=19 // pred_region
          %s177 = sand.u32 %s44, 1
          %s178 = scalar_lea.sflag [#allocation4], %s177
          %s179 = sand.u32 %s44, 1
          %s180 = smul.addr %s179, 8
          %s181 = scalar_lea.vmem [#allocation3], %s180
          %s182 = smul.u32 2, %s27
          %184 = vsyncadd %s178, 0
          %s185 = sadd.s32 %s28, %s182
          %s186 = smul.addr %s185, 4
          %s187 = scalar_lea.hbm %s0, %s186
          %s188 = sshll.u32 %s187, 4
          %s189 = int_to_ptr.hbm [resolvable:$true] %s188
          %s190 = sshll.u32 %s181, 4
          %s191 = int_to_ptr.vmem [resolvable:$true] %s190
          %196 = dma.hbm_to_vmem [thread:$0]  %s189, 128, %s191, %s178, 64, 64, 4
        $region24: #{tpu_custom_call.1} parent=19 // pred_fallthru
          _
      $region20: #{tpu_custom_call.1} parent=5 // pred_fallthru
        _
      %p197 = scmp.le.s32.totalorder 1, %s20
      %p198 = scmp.lt.s32.totalorder %s20, 3
      %p199 = pnand %p197, %p198
      %p200 = pneg %p199
      // Predicated region
      $region25: #{tpu_custom_call.1} parent=5 // pred_check
        _
      $region26: #{tpu_custom_call.1} parent=5 // pred_check_branch
        %202 = sbr.rel (%p199) target = $region28
      $region27: #{tpu_custom_call.1} parent=5 // pred_region
        %s203 = ssub.s32 %s20, 1
        %s204 = sand.u32 %s47, 1
        %s205 = scalar_lea.sflag [#allocation4], %s204
        %s206 = sand.u32 %s47, 1
        %s207 = smul.addr %s206, 8
        %s208 = scalar_lea.vmem [#allocation3], %s207
        // Predicated region
        $region29: #{tpu_custom_call.1} parent=27 // pred_check
          %p209 = pneg %p60
        $region30: #{tpu_custom_call.1} parent=27 // pred_check_branch
          %211 = sbr.rel (%p209) target = $region32
        $region31: #{tpu_custom_call.1} parent=27 // pred_region
          %213 = dma.done %s205, 128
        $region32: #{tpu_custom_call.1} parent=27 // pred_fallthru
          _
        // Predicated region
        $region33: #{tpu_custom_call.1} parent=27 // pred_check
          %p214 = pneg %p86
        $region34: #{tpu_custom_call.1} parent=27 // pred_check_branch
          %216 = sbr.rel (%p214) target = $region36
        $region35: #{tpu_custom_call.1} parent=27 // pred_region
          %218 = dma.done [#allocation7], 1024
        $region36: #{tpu_custom_call.1} parent=27 // pred_fallthru
          _
        %s219 = sand.u32 %s47, 1
        %s220 = scalar_lea.sflag [#allocation4], %s219
        %s221 = sand.u32 %s47, 1
        %s222 = smul.addr %s221, 8
        %s223 = scalar_lea.vmem [#allocation3], %s222
        %p224 = pneg %p60
        %p225 = pneg %p57
        %p226 = pneg %p86
        %p227 = pneg %p83
        %p228 = pneg %p112
        %p229 = pneg %p109
        %s230 = sand.u32 %s99, 1
        %s231 = scalar_lea.sflag [#allocation5], %s230
        %s232 = sand.u32 %s99, 1
        %s233 = smul.addr %s232, 8
        %s234 = scalar_lea.vmem [#allocation8], %s233
        %p235 = pneg %p138
        %p236 = pneg %p135
        %s237 = sand.u32 %s125, 1
        %s238 = scalar_lea.sflag [#allocation10], %s237
        %s239 = sand.u32 %s125, 1
        %s240 = smul.addr %s239, 8
        %s241 = scalar_lea.vmem [#allocation9], %s240
        %s242 = smul.u32 2, %s29
        %s243 = smul.u32 16, %s30
        %s244 = smul.u32 2, %s29
        %p245 = scmp.eq.s32.totalorder %s30, 0
        // Predicated region
        $region37: #{tpu_custom_call.1} parent=27 // pred_check
          %p246 = pneg %p245
        $region38: #{tpu_custom_call.1} parent=27 // pred_check_branch
          %248 = sbr.rel (%p246) target = $region40
        $region39: #{tpu_custom_call.1} parent=27 // pred_region
          %249 = vst [vmem:[#allocation2] sm:$0xff] 0.0
          %250 = vst [vmem:[#allocation2 + $0x8] sm:$0xff] 0.0
        $region40: #{tpu_custom_call.1} parent=27 // pred_fallthru
          _
        %v251 = vld [vmem:[#allocation2] sm:$0xff]
        %v252 = vld [vmem:[#allocation2 + $0x8] sm:$0xff]
        %v253 = vld [vmem:[%s208] sm:$0xf]
        %v254 = vld [vmem:[%s208 + $0x4] sm:$0xf]
        %v255 = vld [vmem:[#allocation6] sm:$0xf]
        %v256 = vld [vmem:[#allocation6 + $0x4] sm:$0xf]
        %v257 = vld [vmem:[#allocation6 + $0x8] sm:$0xf]
        %v258 = vld [vmem:[#allocation6 + $0xc] sm:$0xf]
        %v259 = vld [vmem:[#allocation6 + $0x10] sm:$0xf]
        %v260 = vld [vmem:[#allocation6 + $0x14] sm:$0xf]
        %v261 = vld [vmem:[#allocation6 + $0x18] sm:$0xf]
        %v262 = vld [vmem:[#allocation6 + $0x1c] sm:$0xf]
        %v263 = vld [vmem:[#allocation6 + $0x20] sm:$0xf]
        %v264 = vld [vmem:[#allocation6 + $0x24] sm:$0xf]
        %v265 = vld [vmem:[#allocation6 + $0x28] sm:$0xf]
        %v266 = vld [vmem:[#allocation6 + $0x2c] sm:$0xf]
        %v267 = vld [vmem:[#allocation6 + $0x30] sm:$0xf]
        %v268 = vld [vmem:[#allocation6 + $0x34] sm:$0xf]
        %v269 = vld [vmem:[#allocation6 + $0x38] sm:$0xf]
        %v270 = vld [vmem:[#allocation6 + $0x3c] sm:$0xf]
        %v273 = vunpack.c.l.b16 %v253
        %v274 = vunpack.c.l.b16 %v254
        %v275 = vpack.c.b16 %v274, %v273
        %v293 = vunpack.c.l.b16 %v255
        %v294 = vunpack.c.l.b16 %v256
        %v295 = vunpack.c.l.b16 %v257
        %v296 = vunpack.c.l.b16 %v258
        %v297 = vunpack.c.l.b16 %v259
        %v298 = vunpack.c.l.b16 %v260
        %v299 = vunpack.c.l.b16 %v261
        %v300 = vunpack.c.l.b16 %v262
        %v301 = vunpack.c.l.b16 %v263
        %v302 = vunpack.c.l.b16 %v264
        %v303 = vunpack.c.l.b16 %v265
        %v304 = vunpack.c.l.b16 %v266
        %v305 = vunpack.c.l.b16 %v267
        %v306 = vunpack.c.l.b16 %v268
        %v307 = vunpack.c.l.b16 %v269
        %v308 = vunpack.c.l.b16 %v270
        %v309 = vpack.c.b16 %v294, %v293
        %v310 = vpack.c.b16 %v296, %v295
        %v311 = vpack.c.b16 %v298, %v297
        %v312 = vpack.c.b16 %v300, %v299
        %v313 = vpack.c.b16 %v302, %v301
        %v314 = vpack.c.b16 %v304, %v303
        %v315 = vpack.c.b16 %v306, %v305
        %v316 = vpack.c.b16 %v308, %v307
        %325 = vmatpush.bf16.msra.mxu0 %v316
        %326 = vmatpush.bf16.msra.mxu0 %v315
        %327 = vmatpush.bf16.msra.mxu0 %v314
        %328 = vmatpush.bf16.msra.mxu0 %v313
        %329 = vmatpush.bf16.msra.mxu0 %v312
        %330 = vmatpush.bf16.msra.mxu0 %v311
        %331 = vmatpush.bf16.msra.mxu0 %v310
        %332 = vmatpush.bf16.msra.mxu0 %v309
        %333 = vmatmul.bf16.gmra.mxu0 %v275
        %v334 = vpop.f32.mrf.mxu0
        %v335 = vadd.f32 0.0, %v334
        %v336 = vpop.f32.mrf.mxu0
        %v337 = vadd.f32 0.0, %v336
        %338 = vdwg.mxu0
        %v339 = vadd.f32 %v251, %v335
        %v340 = vadd.f32 %v252, %v337
        %341 = vst [vmem:[#allocation2] sm:$0xff] %v339
        %342 = vst [vmem:[#allocation2 + $0x8] sm:$0xff] %v340
        // Predicated region
        $region41: #{tpu_custom_call.1} parent=27 // pred_check
          %p343 = pneg %p245
        $region42: #{tpu_custom_call.1} parent=27 // pred_check_branch
          %345 = sbr.rel (%p343) target = $region44
        $region43: #{tpu_custom_call.1} parent=27 // pred_region
          %v346 = vld [vmem:[#allocation2] sm:$0xff]
          %v347 = vld [vmem:[#allocation2 + $0x8] sm:$0xff]
          %v348 = vpack.c.bf16 %v346, %v346
          %v349 = vpack.c.bf16 %v347, %v347
          %350 = vst [vmem:[%s234] sm:$0xf] %v348
          %351 = vst [vmem:[%s234 + $0x4] sm:$0xf] %v349
          %v352 = vadd.f32 %v346, %v347
          %v353 = vrot.slane %v352, 4
          %v354 = vadd.f32 %v352, %v353
          %v355 = vrot.slane %v354, 2
          %v356 = vadd.f32 %v354, %v355
          %v357 = vrot.slane %v356, 1
          %v358 = vadd.f32 %v356, %v357
          %v359 = vmul.f32 %v346, %v346
          %v360 = vmul.f32 %v347, %v347
          %v361 = vadd.f32 %v359, %v360
          %v362 = vrot.slane %v361, 4
          %v363 = vadd.f32 %v361, %v362
          %v364 = vrot.slane %v363, 2
          %v365 = vadd.f32 %v363, %v364
          %v366 = vrot.slane %v365, 1
          %v367 = vadd.f32 %v365, %v366
          %vm368 = vcmask 1040384
          %v369 = vsel %vm368, %v358, %v367
          %vm370 = vcmask 1041408
          %v371 = vsel %vm370, %v369, 0.0
          %372 = vst [vmem:[%s241] sm:$0xff] %v371
        $region44: #{tpu_custom_call.1} parent=27 // pred_fallthru
          _
        %s373 = sand.u32 %s99, 1
        %s374 = scalar_lea.sflag [#allocation5], %s373
        %s375 = sand.u32 %s99, 1
        %s376 = smul.addr %s375, 8
        %s377 = scalar_lea.vmem [#allocation8], %s376
        %s378 = sand.u32 %s125, 1
        %s379 = scalar_lea.sflag [#allocation10], %s378
        %s380 = sand.u32 %s125, 1
        %s381 = smul.addr %s380, 8
        %s382 = scalar_lea.vmem [#allocation9], %s381
        // Predicated region
        $region45: #{tpu_custom_call.1} parent=27 // pred_check
          %p383 = pneg %p109
        $region46: #{tpu_custom_call.1} parent=27 // pred_check_branch
          %385 = sbr.rel (%p383) target = $region48
        $region47: #{tpu_custom_call.1} parent=27 // pred_region
          %s386 = smul.u32 2, %s29
          %388 = vsyncadd %s374, 0
          %s389 = smul.addr %s386, 4
          %s390 = scalar_lea.hbm %s2, %s389
          %s391 = sshll.u32 %s377, 4
          %s392 = int_to_ptr.vmem [resolvable:$true] %s391
          %s393 = sshll.u32 %s390, 4
          %s394 = int_to_ptr.hbm [resolvable:$true] %s393
          %399 = dma.vmem_to_hbm [thread:$0]  %s392, 128, %s394, %s374, 64, 64, 4
        $region48: #{tpu_custom_call.1} parent=27 // pred_fallthru
          _
        // Predicated region
        $region49: #{tpu_custom_call.1} parent=27 // pred_check
          %p400 = pneg %p135
        $region50: #{tpu_custom_call.1} parent=27 // pred_check_branch
          %402 = sbr.rel (%p400) target = $region52
        $region51: #{tpu_custom_call.1} parent=27 // pred_region
          %404 = vsyncadd %s379, 0
          %s405 = smul.addr %s29, 8
          %s406 = scalar_lea.hbm %s3, %s405
          %s408 = sshll.u32 %s382, 4
          %s409 = int_to_ptr.vmem [resolvable:$true] %s408
          %s410 = sshll.u32 %s406, 4
          %s411 = int_to_ptr.hbm [resolvable:$true] %s410
          %413 = dma.vmem_to_hbm [thread:$0]  %s409, 128, %s411, %s379
        $region52: #{tpu_custom_call.1} parent=27 // pred_fallthru
          _
      $region28: #{tpu_custom_call.1} parent=5 // pred_fallthru
        _
      %p414 = scmp.le.s32.totalorder 2, %s20
      // Predicated region
      $region53: #{tpu_custom_call.1} parent=5 // pred_check
        %p415 = pneg %p414
      $region54: #{tpu_custom_call.1} parent=5 // pred_check_branch
        %417 = sbr.rel (%p415) target = $region56
      $region55: #{tpu_custom_call.1} parent=5 // pred_region
        %s418 = ssub.s32 %s20, 2
        // Predicated region
        $region57: #{tpu_custom_call.1} parent=55 // pred_check
          %p419 = pneg %p115
        $region58: #{tpu_custom_call.1} parent=55 // pred_check_branch
          %421 = sbr.rel (%p419) target = $region60
        $region59: #{tpu_custom_call.1} parent=55 // pred_region
          %s422 = sand.u32 %s100, 1
          %s423 = scalar_lea.sflag [#allocation5], %s422
          %s424 = sand.u32 %s100, 1
          %s425 = smul.addr %s424, 8
          %s426 = scalar_lea.vmem [#allocation8], %s425
          %428 = dma.done %s423, 128
        $region60: #{tpu_custom_call.1} parent=55 // pred_fallthru
          _
        // Predicated region
        $region61: #{tpu_custom_call.1} parent=55 // pred_check
          %p429 = pneg %p141
        $region62: #{tpu_custom_call.1} parent=55 // pred_check_branch
          %431 = sbr.rel (%p429) target = $region64
        $region63: #{tpu_custom_call.1} parent=55 // pred_region
          %s432 = sand.u32 %s126, 1
          %s433 = scalar_lea.sflag [#allocation10], %s432
          %s434 = sand.u32 %s126, 1
          %s435 = smul.addr %s434, 8
          %s436 = scalar_lea.vmem [#allocation9], %s435
          %438 = dma.done %s433, 128
        $region64: #{tpu_custom_call.1} parent=55 // pred_fallthru
          _
      $region56: #{tpu_custom_call.1} parent=5 // pred_fallthru
        _
    $region6: #{tpu_custom_call.1} parent=1 // loop_footer
      %s24 = sadd.s32 1, %s20
    $region7: #{tpu_custom_call.1} parent=1 // loop_footer_branch
      %19 = sbr.rel target = $region3
    $region8: #{tpu_custom_call.1} parent=1 // loop_exit
      _
    %439 = vsyncpa [#allocation4], 1
    %s440 = scalar_lea.sflag [#allocation4], 1
    %441 = vsyncpa %s440, 1
    %442 = vsyncpa [#allocation7], 1
    %443 = vsyncpa [#allocation5], 1
    %s444 = scalar_lea.sflag [#allocation5], 1
    %445 = vsyncpa %s444, 1
    %446 = vsyncpa [#allocation10], 1
    %s447 = scalar_lea.sflag [#allocation10], 1
    %448 = vsyncpa %s447, 1

</llo_original>
